<compile_context>
chip_gen: v5e
topology: v5e:2x2
jax: 0.10.0
libtpu: 0.0.40
codegen_flags: <defaults>
</compile_context>

<pallas_src>
import functools

import jax
import jax.numpy as jnp
from jax.experimental import pallas as pl
from jax.experimental.pallas import tpu as pltpu

HIDDEN = 256
LANE = 128            # TPU lane width; output feature dim padded to this.
SUBLANE = 16          # bf16-safe minimum batch-tile granularity (packed sublane group)
DEFAULT_TILE_B = 2048 # amortizes ~0.35 us/step grid overhead; ~10 MiB VMEM footprint


def _round_up(x, m):
    return ((x + m - 1) // m) * m


def _cdiv(a, b):
    return -(-a // b)


def bc_forward_kernel(x_ref, w1_ref, b1_ref, w2_ref, b2_ref, w3_ref, b3_ref, o_ref):
    # One batch tile per grid step. Three fused MXU matmuls (bf16 feeds, f32
    # accumulation), VPU ReLU, EUP tanh, lane-dense bf16 store.
    x = x_ref[...].astype(jnp.bfloat16)                                   # in-kernel cast

    h1 = jnp.dot(x, w1_ref[...], preferred_element_type=jnp.float32) + b1_ref[...]
    h1 = jnp.maximum(h1, 0.0).astype(jnp.bfloat16)

    h2 = jnp.dot(h1, w2_ref[...], preferred_element_type=jnp.float32) + b2_ref[...]
    h2 = jnp.maximum(h2, 0.0).astype(jnp.bfloat16)

    h3 = jnp.dot(h2, w3_ref[...], preferred_element_type=jnp.float32) + b3_ref[...]
    o_ref[...] = jnp.tanh(h3).astype(o_ref.dtype)                         # bf16 [tb, 128]


def prepare_params(params):
    """One-time (hoisted) param prep: bf16 MXU feeds, lane-padded final layer.

    Padded lanes of w3/b3 are zero -> tanh(0)=0 in the padded output columns,
    which the wrapper slices off.
    """
    n_actions = params["w3"].shape[1]
    n_out_pad = _round_up(n_actions, LANE)
    w3 = jnp.zeros((HIDDEN, n_out_pad), jnp.bfloat16).at[:, :n_actions].set(
        params["w3"].astype(jnp.bfloat16))
    b3 = jnp.zeros((1, n_out_pad), jnp.float32).at[:, :n_actions].set(
        params["b3"].astype(jnp.float32))
    return {
        "w1": params["w1"].astype(jnp.bfloat16),
        "b1": params["b1"].astype(jnp.float32),
        "w2": params["w2"].astype(jnp.bfloat16),
        "b2": params["b2"].astype(jnp.float32),
        "w3": w3,
        "b3": b3,
    }


def _choose_tiling(B, tile_b):
    """Pick (eff_tile, b_pad): balanced tiles, v7x 2-core split, small-B friendly."""
    if B <= LANE:
        # Tiny batch: single tile rounded to the bf16 sublane pack (16 rows).
        eff_tile = _round_up(max(B, 1), SUBLANE)
        return eff_tile, eff_tile
    # >= 2 grid steps so dimension_semantics=("parallel",) can shard the batch
    # across v7x's 2 TensorCores; balance tiles so padding stays < 128 rows/tile.
    n_tiles = max(2, _cdiv(B, tile_b))
    eff_tile = min(tile_b, _round_up(_cdiv(B, n_tiles), LANE))
    b_pad = _round_up(B, eff_tile)
    return eff_tile, b_pad


@functools.partial(jax.jit, static_argnames=("n_actions", "tile_b"))
def bc_forward(x, prepared, *, n_actions, tile_b=DEFAULT_TILE_B):
    """x: [B, n_states] float32; prepared: output of prepare_params(). Returns f32 [B, n_actions]."""
    B, n_states = x.shape
    w1, b1 = prepared["w1"], prepared["b1"]
    w2, b2 = prepared["w2"], prepared["b2"]
    w3, b3 = prepared["w3"], prepared["b3"]
    n_out_pad = w3.shape[1]

    eff_tile, b_pad = _choose_tiling(B, tile_b)
    grid = (b_pad // eff_tile,)

    xp = x
    if b_pad != B:
        xp = jnp.pad(x, ((0, b_pad - B), (0, 0)))  # fuses under jit

    x_spec = pl.BlockSpec((eff_tile, n_states), lambda i: (i, 0))
    out_spec = pl.BlockSpec((eff_tile, n_out_pad), lambda i: (i, 0))
    # Weights/biases: constant index_map -> loaded once, VMEM-resident across steps.
    const_spec = lambda shape: pl.BlockSpec(shape, lambda i: (0, 0))

    flops = 2 * b_pad * (n_states * HIDDEN + HIDDEN * HIDDEN + HIDDEN * n_out_pad)
    bytes_accessed = (
        xp.size * xp.dtype.itemsize
        + (w1.size + w2.size + w3.size) * 2
        + (b1.size + b2.size + b3.size) * 4
        + b_pad * n_out_pad * 2  # bf16 output writeback
    )

    out_padded = pl.pallas_call(
        bc_forward_kernel,
        out_shape=jax.ShapeDtypeStruct((b_pad, n_out_pad), jnp.bfloat16),
        grid=grid,
        in_specs=[
            x_spec,
            const_spec((n_states, HIDDEN)),
            const_spec((1, HIDDEN)),
            const_spec((HIDDEN, HIDDEN)),
            const_spec((1, HIDDEN)),
            const_spec((HIDDEN, n_out_pad)),
            const_spec((1, n_out_pad)),
        ],
        out_specs=out_spec,
        compiler_params=pltpu.CompilerParams(
            dimension_semantics=("parallel",),
            vmem_limit_bytes=32 * 1024 * 1024,  # safe on v5e/v6e/v7x; >> ~10 MiB used at tb=2048
        ),
        cost_estimate=pl.CostEstimate(
            flops=flops,
            transcendentals=b_pad * n_out_pad,
            bytes_accessed=bytes_accessed,
        ),
    )(xp, w1, b1, w2, b2, w3, b3)

    # Slice off lane/batch padding and restore the module's f32 interface
    # (tiny op on [B, n_actions]; fuses under jit).
    return out_padded[:B, :n_actions].astype(jnp.float32)


def init_params(key, n_states, n_actions, hidden=HIDDEN):
    """PyTorch nn.Linear-style init (uniform +/- 1/sqrt(fan_in)); weights stored [in, out]."""
    ks = jax.random.split(key, 6)

    def linear(kw, kb, fan_in, fan_out):
        bound = 1.0 / jnp.sqrt(fan_in)
        w = jax.random.uniform(kw, (fan_in, fan_out), jnp.float32, -bound, bound)
        b = jax.random.uniform(kb, (1, fan_out), jnp.float32, -bound, bound)
        return w, b

    w1, b1 = linear(ks[0], ks[1], n_states, hidden)
    w2, b2 = linear(ks[2], ks[3], hidden, hidden)
    w3, b3 = linear(ks[4], ks[5], hidden, n_actions)
    return {"w1": w1, "b1": b1, "w2": w2, "b2": b2, "w3": w3, "b3": b3}


def bc_forward_ref(x, params):
    """Pure-JAX reference mirroring the kernel's bf16-feed / f32-accumulate math (f32 output)."""
    xb = x.astype(jnp.bfloat16)
    w1 = params["w1"].astype(jnp.bfloat16)
    w2 = params["w2"].astype(jnp.bfloat16)
    w3 = params["w3"].astype(jnp.bfloat16)
    h1 = jnp.maximum(
        jnp.dot(xb, w1, preferred_element_type=jnp.float32) + params["b1"], 0.0
    ).astype(jnp.bfloat16)
    h2 = jnp.maximum(
        jnp.dot(h1, w2, preferred_element_type=jnp.float32) + params["b2"], 0.0
    ).astype(jnp.bfloat16)
    h3 = jnp.dot(h2, w3, preferred_element_type=jnp.float32) + params["b3"]
    return jnp.tanh(h3)


# TODO(synk): MSELoss / Adam optimizer (training step) from the PyTorch module are not
# part of the forward pass and are not implemented here.

if __name__ == "__main__":
    key = jax.random.PRNGKey(0)
    k_param, k_x = jax.random.split(key)

    batch = 8
    n_states = 32
    n_actions = 8

    params = init_params(k_param, n_states, n_actions)
    x = jax.random.normal(k_x, (batch, n_states), dtype=jnp.float32)

    prepared = prepare_params(params)  # hoisted one-time prep, reused across calls

    out = jax.block_until_ready(bc_forward(x, prepared, n_actions=n_actions))
    ref = bc_forward_ref(x, params)

    assert out.shape == (batch, n_actions)
    assert out.dtype == jnp.float32
    # bf16 output store => tolerance covers one bf16 ulp at |y| <= 1 (~8e-3).
    assert jnp.allclose(out, ref, atol=8e-3, rtol=8e-3), "mismatch vs JAX reference"

    print("KERNEL_OK")
</pallas_src>

<mosaic_0001>
module attributes {stable_mosaic.version = 11 : i64} {
  func.func @bc_forward_kernel(%arg0: i32, %arg1: memref<16x32xf32, #tpu.memory_space<vmem>>, %arg2: memref<32x256xbf16, #tpu.memory_space<vmem>>, %arg3: memref<1x256xf32, #tpu.memory_space<vmem>>, %arg4: memref<256x256xbf16, #tpu.memory_space<vmem>>, %arg5: memref<1x256xf32, #tpu.memory_space<vmem>>, %arg6: memref<256x128xbf16, #tpu.memory_space<vmem>>, %arg7: memref<1x128xf32, #tpu.memory_space<vmem>>, %arg8: memref<16x128xbf16, #tpu.memory_space<vmem>>) attributes {dimension_semantics = [#tpu.dimension_semantics<parallel>], iteration_bounds = array<i64: 1>, scalar_prefetch = 0 : i64, scratch_operands = 0 : i64, tpu.core_type = #tpu.core_type<tc>, window_params = [{transform_indices = @transform_0, window_bounds = array<i64: 16, 32>}, {pipeline_mode = #tpu.pipeline_mode<synchronous>, transform_indices = @transform_1, window_bounds = array<i64: 32, 256>}, {pipeline_mode = #tpu.pipeline_mode<synchronous>, transform_indices = @transform_2, window_bounds = array<i64: 1, 256>}, {pipeline_mode = #tpu.pipeline_mode<synchronous>, transform_indices = @transform_3, window_bounds = array<i64: 256, 256>}, {pipeline_mode = #tpu.pipeline_mode<synchronous>, transform_indices = @transform_4, window_bounds = array<i64: 1, 256>}, {pipeline_mode = #tpu.pipeline_mode<synchronous>, transform_indices = @transform_5, window_bounds = array<i64: 256, 128>}, {pipeline_mode = #tpu.pipeline_mode<synchronous>, transform_indices = @transform_6, window_bounds = array<i64: 1, 128>}, {transform_indices = @transform_7, window_bounds = array<i64: 16, 128>}]} {
    %c0 = arith.constant 0 : index
    %c0_0 = arith.constant 0 : index
    %0 = vector.load %arg1[%c0, %c0_0] : memref<16x32xf32, #tpu.memory_space<vmem>>, vector<16x32xf32>
    %1 = arith.truncf %0 : vector<16x32xf32> to vector<16x32xbf16>
    %c0_1 = arith.constant 0 : index
    %c0_2 = arith.constant 0 : index
    %2 = vector.load %arg2[%c0_1, %c0_2] : memref<32x256xbf16, #tpu.memory_space<vmem>>, vector<32x256xbf16>
    %cst = arith.constant dense<0.000000e+00> : vector<16x256xf32>
    %3 = tpu.matmul %1, %2, %cst {dimension_numbers = #tpu.dot_dimension_numbers<[1], [0], [0], [1], [0, 0, 1, 1], [], []>} : vector<16x32xbf16>, vector<32x256xbf16>, vector<16x256xf32> -> vector<16x256xf32>
    %c0_3 = arith.constant 0 : index
    %c0_4 = arith.constant 0 : index
    %4 = vector.load %arg3[%c0_3, %c0_4] : memref<1x256xf32, #tpu.memory_space<vmem>>, vector<1x256xf32>
    %5 = vector.broadcast %4 : vector<1x256xf32> to vector<16x256xf32>
    %6 = arith.addf %3, %5 : vector<16x256xf32>
    %cst_5 = arith.constant 0.000000e+00 : f32
    %7 = vector.broadcast %cst_5 : f32 to vector<16x256xf32>
    %8 = arith.maximumf %6, %7 : vector<16x256xf32>
    %9 = arith.truncf %8 : vector<16x256xf32> to vector<16x256xbf16>
    %c0_6 = arith.constant 0 : index
    %c0_7 = arith.constant 0 : index
    %10 = vector.load %arg4[%c0_6, %c0_7] : memref<256x256xbf16, #tpu.memory_space<vmem>>, vector<256x256xbf16>
    %cst_8 = arith.constant dense<0.000000e+00> : vector<16x256xf32>
    %11 = tpu.matmul %9, %10, %cst_8 {dimension_numbers = #tpu.dot_dimension_numbers<[1], [0], [0], [1], [0, 0, 1, 1], [], []>} : vector<16x256xbf16>, vector<256x256xbf16>, vector<16x256xf32> -> vector<16x256xf32>
    %c0_9 = arith.constant 0 : index
    %c0_10 = arith.constant 0 : index
    %12 = vector.load %arg5[%c0_9, %c0_10] : memref<1x256xf32, #tpu.memory_space<vmem>>, vector<1x256xf32>
    %13 = vector.broadcast %12 : vector<1x256xf32> to vector<16x256xf32>
    %14 = arith.addf %11, %13 : vector<16x256xf32>
    %cst_11 = arith.constant 0.000000e+00 : f32
    %15 = vector.broadcast %cst_11 : f32 to vector<16x256xf32>
    %16 = arith.maximumf %14, %15 : vector<16x256xf32>
    %17 = arith.truncf %16 : vector<16x256xf32> to vector<16x256xbf16>
    %c0_12 = arith.constant 0 : index
    %c0_13 = arith.constant 0 : index
    %18 = vector.load %arg6[%c0_12, %c0_13] : memref<256x128xbf16, #tpu.memory_space<vmem>>, vector<256x128xbf16>
    %cst_14 = arith.constant dense<0.000000e+00> : vector<16x128xf32>
    %19 = tpu.matmul %17, %18, %cst_14 {dimension_numbers = #tpu.dot_dimension_numbers<[1], [0], [0], [1], [0, 0, 1, 1], [], []>} : vector<16x256xbf16>, vector<256x128xbf16>, vector<16x128xf32> -> vector<16x128xf32>
    %c0_15 = arith.constant 0 : index
    %c0_16 = arith.constant 0 : index
    %20 = vector.load %arg7[%c0_15, %c0_16] : memref<1x128xf32, #tpu.memory_space<vmem>>, vector<1x128xf32>
    %21 = vector.broadcast %20 : vector<1x128xf32> to vector<16x128xf32>
    %22 = arith.addf %19, %21 : vector<16x128xf32>
    %23 = math.tanh %22 : vector<16x128xf32>
    %24 = arith.truncf %23 : vector<16x128xf32> to vector<16x128xbf16>
    %c0_17 = arith.constant 0 : index
    %c0_18 = arith.constant 0 : index
    %25 = vector.load %arg8[%c0_17, %c0_18] : memref<16x128xbf16, #tpu.memory_space<vmem>>, vector<16x128xbf16>
    tpu.vector_store %arg8[%c0_17, %c0_18], %24 {strides = array<i32>} : memref<16x128xbf16, #tpu.memory_space<vmem>>, vector<16x128xbf16>,
    return
  }
  func.func @transform_0(%arg0: i32) -> (i32, i32) {
    %c0_i32 = arith.constant 0 : i32
    %c0_i32_0 = arith.constant 0 : i32
    return %arg0, %c0_i32 : i32, i32
  }
  func.func @transform_1(%arg0: i32) -> (i32, i32) {
    %c0_i32 = arith.constant 0 : i32
    %c0_i32_0 = arith.constant 0 : i32
    %c0_i32_1 = arith.constant 0 : i32
    return %c0_i32, %c0_i32_0 : i32, i32
  }
  func.func @transform_2(%arg0: i32) -> (i32, i32) {
    %c0_i32 = arith.constant 0 : i32
    %c0_i32_0 = arith.constant 0 : i32
    %c0_i32_1 = arith.constant 0 : i32
    return %c0_i32, %c0_i32_0 : i32, i32
  }
  func.func @transform_3(%arg0: i32) -> (i32, i32) {
    %c0_i32 = arith.constant 0 : i32
    %c0_i32_0 = arith.constant 0 : i32
    %c0_i32_1 = arith.constant 0 : i32
    return %c0_i32, %c0_i32_0 : i32, i32
  }
  func.func @transform_4(%arg0: i32) -> (i32, i32) {
    %c0_i32 = arith.constant 0 : i32
    %c0_i32_0 = arith.constant 0 : i32
    %c0_i32_1 = arith.constant 0 : i32
    return %c0_i32, %c0_i32_0 : i32, i32
  }
  func.func @transform_5(%arg0: i32) -> (i32, i32) {
    %c0_i32 = arith.constant 0 : i32
    %c0_i32_0 = arith.constant 0 : i32
    %c0_i32_1 = arith.constant 0 : i32
    return %c0_i32, %c0_i32_0 : i32, i32
  }
  func.func @transform_6(%arg0: i32) -> (i32, i32) {
    %c0_i32 = arith.constant 0 : i32
    %c0_i32_0 = arith.constant 0 : i32
    %c0_i32_1 = arith.constant 0 : i32
    return %c0_i32, %c0_i32_0 : i32, i32
  }
  func.func @transform_7(%arg0: i32) -> (i32, i32) {
    %c0_i32 = arith.constant 0 : i32
    %c0_i32_0 = arith.constant 0 : i32
    return %arg0, %c0_i32 : i32, i32
  }
}

</mosaic_0001>

<llo_original>
// kernel: bc_forward.1
$region0: #{bc_forward.1}
  #allocation0 [shape = 'u32[]', space=smem, size = 0x4, offset = 0x4, fixed_abs, tag = 'smem constant byte address 0x4 - core index']
  #allocation1 [shape = 'u32[72,128]{1,0:T(1,128)}', space=vmem, size = 0x9000, scoped, tag = 'internal scratch']
  %s0 = inlined_call_operand.vmem [shape: f32[16,32], index: 0, kind: input, shape index: {}]
  %s1 = inlined_call_operand.hbm [shape: bf16[32,256], index: 1, kind: input, shape index: {}]
  %s2 = inlined_call_operand.vmem [shape: f32[1,256], index: 2, kind: input, shape index: {}]
  %s3 = inlined_call_operand.hbm [shape: bf16[256,256], index: 3, kind: input, shape index: {}]
  %s4 = inlined_call_operand.vmem [shape: f32[1,256], index: 4, kind: input, shape index: {}]
  %s5 = inlined_call_operand.hbm [shape: bf16[256,128], index: 5, kind: input, shape index: {}]
  %s6 = inlined_call_operand.vmem [shape: f32[1,128], index: 6, kind: input, shape index: {}]
  %s7 = inlined_call_operand.vmem [shape: bf16[16,128], index: 7, kind: output, shape index: {}]
  %s8 = sld [smem:[#allocation0]]
  $region50: #{bc_forward.1} parent=0
    _
  %s10 = ssub.s32 1, %s8
  %s11 = scalar_select 0, %s10, %s8
  $region1: #{bc_forward.1} parent=0
    #allocation2 [shape = 'u8[16384]{0}', space=vmem, size = 0x4000, scoped, tag = 'input window, operand 1, single buffered']
    #allocation3 [shape = 's32[1]{0}', space=sflag, size = 0x4, scoped, tag = 'scoped memory for bc_forward.1']
    #allocation4 [shape = 'u8[131072]{0}', space=vmem, size = 0x20000, scoped, tag = 'input window, operand 3, single buffered']
    #allocation5 [shape = 's32[1]{0}', space=sflag, size = 0x4, scoped, tag = 'scoped memory for bc_forward.1']
    #allocation6 [shape = 'u8[65536]{0}', space=vmem, size = 0x10000, scoped, tag = 'input window, operand 5, single buffered']
    %12 = vsyncpa [#allocation3], 0
    %13 = vsyncpa [#allocation5], 0
    // Predicated region
    $region2: #{bc_forward.1} parent=1 // pred_check
      _
    $region3: #{bc_forward.1} parent=1 // pred_check_branch
      %15 = sbr.rel (0) target = $region5
    $region4: #{bc_forward.1} parent=1 // pred_region
      _
    $region5: #{bc_forward.1} parent=1 // pred_fallthru
      _
    // Predicated region
    $region6: #{bc_forward.1} parent=1 // pred_check
      _
    $region7: #{bc_forward.1} parent=1 // pred_check_branch
      %17 = sbr.rel (0) target = $region9
    $region8: #{bc_forward.1} parent=1 // pred_region
      %19 = vsyncadd [#allocation3], 0
      %s20 = sshll.u32 %s1, 4
      %s21 = int_to_ptr.hbm [resolvable:$true] %s20
      %s22 = sshll.u32 [#allocation2], 4
      %s23 = int_to_ptr.vmem [resolvable:$true] %s22
      %28 = dma.hbm_to_vmem [thread:$0]  %s21, 512, %s23, [#allocation3], 128, 128, 8
    $region9: #{bc_forward.1} parent=1 // pred_fallthru
      _
    // Predicated region
    $region10: #{bc_forward.1} parent=1 // pred_check
      _
    $region11: #{bc_forward.1} parent=1 // pred_check_branch
      %30 = sbr.rel (0) target = $region13
    $region12: #{bc_forward.1} parent=1 // pred_region
      _
    $region13: #{bc_forward.1} parent=1 // pred_fallthru
      _
    // Predicated region
    $region14: #{bc_forward.1} parent=1 // pred_check
      _
    $region15: #{bc_forward.1} parent=1 // pred_check_branch
      %32 = sbr.rel (0) target = $region17
    $region16: #{bc_forward.1} parent=1 // pred_region
      %34 = vsyncadd [#allocation5], 0
      %s35 = sshll.u32 %s3, 4
      %s36 = int_to_ptr.hbm [resolvable:$true] %s35
      %s37 = sshll.u32 [#allocation4], 4
      %s38 = int_to_ptr.vmem [resolvable:$true] %s37
      %43 = dma.hbm_to_vmem [thread:$0]  %s36, 4096, %s38, [#allocation5], 128, 128, 8
    $region17: #{bc_forward.1} parent=1 // pred_fallthru
      _
    // Predicated region
    $region18: #{bc_forward.1} parent=1 // pred_check
      _
    $region19: #{bc_forward.1} parent=1 // pred_check_branch
      %45 = sbr.rel (0) target = $region21
    $region20: #{bc_forward.1} parent=1 // pred_region
      _
    $region21: #{bc_forward.1} parent=1 // pred_fallthru
      _
    // Predicated region
    $region22: #{bc_forward.1} parent=1 // pred_check
      _
    $region23: #{bc_forward.1} parent=1 // pred_check_branch
      %47 = sbr.rel (0) target = $region25
    $region24: #{bc_forward.1} parent=1 // pred_region
      %49 = vsyncadd [#allocation5], 0
      %s50 = sshll.u32 %s5, 4
      %s51 = int_to_ptr.hbm [resolvable:$true] %s50
      %s52 = sshll.u32 [#allocation6], 4
      %s53 = int_to_ptr.vmem [resolvable:$true] %s52
      %58 = dma.hbm_to_vmem [thread:$0]  %s51, 2048, %s53, [#allocation5], 64, 64, 4
    $region25: #{bc_forward.1} parent=1 // pred_fallthru
      _
    // Predicated region
    $region26: #{bc_forward.1} parent=1 // pred_check
      _
    $region27: #{bc_forward.1} parent=1 // pred_check_branch
      %60 = sbr.rel (0) target = $region29
    $region28: #{bc_forward.1} parent=1 // pred_region
      _
    $region29: #{bc_forward.1} parent=1 // pred_fallthru
      _
    // Predicated region
    $region30: #{bc_forward.1} parent=1 // pred_check
      _
    $region31: #{bc_forward.1} parent=1 // pred_check_branch
      %62 = sbr.rel (0) target = $region33
    $region32: #{bc_forward.1} parent=1 // pred_region
      %64 = dma.done [#allocation3], 512
    $region33: #{bc_forward.1} parent=1 // pred_fallthru
      _
    // Predicated region
    $region34: #{bc_forward.1} parent=1 // pred_check
      _
    $region35: #{bc_forward.1} parent=1 // pred_check_branch
      %66 = sbr.rel (0) target = $region37
    $region36: #{bc_forward.1} parent=1 // pred_region
      %68 = dma.done [#allocation5], 4096
    $region37: #{bc_forward.1} parent=1 // pred_fallthru
      _
    // Predicated region
    $region38: #{bc_forward.1} parent=1 // pred_check
      _
    $region39: #{bc_forward.1} parent=1 // pred_check_branch
      %70 = sbr.rel (0) target = $region41
    $region40: #{bc_forward.1} parent=1 // pred_region
      %72 = dma.done [#allocation5], 2048
    $region41: #{bc_forward.1} parent=1 // pred_fallthru
      _
    %v74 = vld [vmem:[%s0] sm:$0xff]
    %v75 = vld [vmem:[%s0 + $0x8] sm:$0xff]
    %v76 = vpack.c.bf16 %v75, %v74
    %v77 = vld [vmem:[#allocation2] sm:$0xff]
    %v78 = vld [vmem:[#allocation2 + $0x8] sm:$0xff]
    %v79 = vld [vmem:[#allocation2 + $0x10] sm:$0xff]
    %v80 = vld [vmem:[#allocation2 + $0x18] sm:$0xff]
    %v81 = vld [vmem:[%s2] sm:$0x3]
    %v83 = vperm.slane %v81, 0
    %v84 = vperm.slane %v81, 1
    %v91 = vunpack.c.l.b16 %v77
    %v92 = vunpack.c.h.b16 %v77
    %v93 = vunpack.c.l.b16 %v78
    %v94 = vunpack.c.h.b16 %v78
    %v95 = vunpack.c.l.b16 %v79
    %v96 = vunpack.c.h.b16 %v79
    %v97 = vunpack.c.l.b16 %v80
    %v98 = vunpack.c.h.b16 %v80
    %v99 = vpack.c.b16 %v93, %v91
    %v100 = vpack.c.b16 %v94, %v92
    %v101 = vpack.c.b16 %v97, %v95
    %v102 = vpack.c.b16 %v98, %v96
    %vm107 = vcmask 261120
    %v109 = vsel %vm107, %v76, 0
    %111 = vmatpush.bf16.msra.mxu0 0
    %112 = vmatpush.bf16.msra.mxu0 0
    %113 = vmatpush.bf16.msra.mxu0 0
    %114 = vmatpush.bf16.msra.mxu0 0
    %115 = vmatpush.bf16.msra.mxu0 0
    %116 = vmatpush.bf16.msra.mxu0 0
    %117 = vmatpush.bf16.msra.mxu0 %v101
    %118 = vmatpush.bf16.msra.mxu0 %v99
    %119 = vmatmul.bf16.gmra.mxu0 %v109
    %v120 = vpop.f32.mrf.mxu0
    %v121 = vadd.f32 %v83, %v120
    %v122 = vpop.f32.mrf.mxu0
    %v123 = vadd.f32 %v83, %v122
    %124 = vdwg.mxu0
    %125 = vmatpush.bf16.msra.mxu0 0
    %126 = vmatpush.bf16.msra.mxu0 0
    %127 = vmatpush.bf16.msra.mxu0 0
    %128 = vmatpush.bf16.msra.mxu0 0
    %129 = vmatpush.bf16.msra.mxu0 0
    %130 = vmatpush.bf16.msra.mxu0 0
    %131 = vmatpush.bf16.msra.mxu0 %v102
    %132 = vmatpush.bf16.msra.mxu0 %v100
    %133 = vmatmul.bf16.gmra.mxu0 %v109
    %v134 = vpop.f32.mrf.mxu0
    %v135 = vadd.f32 %v84, %v134
    %v136 = vpop.f32.mrf.mxu0
    %v137 = vadd.f32 %v84, %v136
    %138 = vdwg.mxu0
    %v139 = vmax.f32 %v121, 0.0
    %v140 = vmax.f32 %v135, 0.0
    %v141 = vmax.f32 %v123, 0.0
    %v142 = vmax.f32 %v137, 0.0
    %v143 = vpack.c.bf16 %v141, %v139
    %v144 = vpack.c.bf16 %v142, %v140
    %v145 = vld [vmem:[#allocation4] sm:$0xff]
    %v146 = vld [vmem:[#allocation4 + $0x8] sm:$0xff]
    %v147 = vld [vmem:[#allocation4 + $0x10] sm:$0xff]
    %v148 = vld [vmem:[#allocation4 + $0x18] sm:$0xff]
    %v149 = vld [vmem:[#allocation4 + $0x20] sm:$0xff]
    %v150 = vld [vmem:[#allocation4 + $0x28] sm:$0xff]
    %v151 = vld [vmem:[#allocation4 + $0x30] sm:$0xff]
    %v152 = vld [vmem:[#allocation4 + $0x38] sm:$0xff]
    %v153 = vld [vmem:[#allocation4 + $0x40] sm:$0xff]
    %v154 = vld [vmem:[#allocation4 + $0x48] sm:$0xff]
    %v155 = vld [vmem:[#allocation4 + $0x50] sm:$0xff]
    %v156 = vld [vmem:[#allocation4 + $0x58] sm:$0xff]
    %v157 = vld [vmem:[#allocation4 + $0x60] sm:$0xff]
    %v158 = vld [vmem:[#allocation4 + $0x68] sm:$0xff]
    %v159 = vld [vmem:[#allocation4 + $0x70] sm:$0xff]
    %v160 = vld [vmem:[#allocation4 + $0x78] sm:$0xff]
    %v161 = vld [vmem:[#allocation4 + $0x80] sm:$0xff]
    %v162 = vld [vmem:[#allocation4 + $0x88] sm:$0xff]
    %v163 = vld [vmem:[#allocation4 + $0x90] sm:$0xff]
    %v164 = vld [vmem:[#allocation4 + $0x98] sm:$0xff]
    %v165 = vld [vmem:[#allocation4 + $0xa0] sm:$0xff]
    %v166 = vld [vmem:[#allocation4 + $0xa8] sm:$0xff]
    %v167 = vld [vmem:[#allocation4 + $0xb0] sm:$0xff]
    %v168 = vld [vmem:[#allocation4 + $0xb8] sm:$0xff]
    %v169 = vld [vmem:[#allocation4 + $0xc0] sm:$0xff]
    %v170 = vld [vmem:[#allocation4 + $0xc8] sm:$0xff]
    %v171 = vld [vmem:[#allocation4 + $0xd0] sm:$0xff]
    %v172 = vld [vmem:[#allocation4 + $0xd8] sm:$0xff]
    %v173 = vld [vmem:[#allocation4 + $0xe0] sm:$0xff]
    %v174 = vld [vmem:[#allocation4 + $0xe8] sm:$0xff]
    %v175 = vld [vmem:[#allocation4 + $0xf0] sm:$0xff]
    %v176 = vld [vmem:[#allocation4 + $0xf8] sm:$0xff]
    %v177 = vld [vmem:[%s4] sm:$0x3]
    %v179 = vperm.slane %v177, 0
    %v180 = vperm.slane %v177, 1
    %v215 = vunpack.c.l.b16 %v145
    %v216 = vunpack.c.h.b16 %v145
    %v217 = vunpack.c.l.b16 %v146
    %v218 = vunpack.c.h.b16 %v146
    %v219 = vunpack.c.l.b16 %v147
    %v220 = vunpack.c.h.b16 %v147
    %v221 = vunpack.c.l.b16 %v148
    %v222 = vunpack.c.h.b16 %v148
    %v223 = vunpack.c.l.b16 %v149
    %v224 = vunpack.c.h.b16 %v149
    %v225 = vunpack.c.l.b16 %v150
    %v226 = vunpack.c.h.b16 %v150
    %v227 = vunpack.c.l.b16 %v151
    %v228 = vunpack.c.h.b16 %v151
    %v229 = vunpack.c.l.b16 %v152
    %v230 = vunpack.c.h.b16 %v152
    %v231 = vunpack.c.l.b16 %v153
    %v232 = vunpack.c.h.b16 %v153
    %v233 = vunpack.c.l.b16 %v154
    %v234 = vunpack.c.h.b16 %v154
    %v235 = vunpack.c.l.b16 %v155
    %v236 = vunpack.c.h.b16 %v155
    %v237 = vunpack.c.l.b16 %v156
    %v238 = vunpack.c.h.b16 %v156
    %v239 = vunpack.c.l.b16 %v157
    %v240 = vunpack.c.h.b16 %v157
    %v241 = vunpack.c.l.b16 %v158
    %v242 = vunpack.c.h.b16 %v158
    %v243 = vunpack.c.l.b16 %v159
    %v244 = vunpack.c.h.b16 %v159
    %v245 = vunpack.c.l.b16 %v160
    %v246 = vunpack.c.h.b16 %v160
    %v247 = vunpack.c.l.b16 %v161
    %v248 = vunpack.c.h.b16 %v161
    %v249 = vunpack.c.l.b16 %v162
    %v250 = vunpack.c.h.b16 %v162
    %v251 = vunpack.c.l.b16 %v163
    %v252 = vunpack.c.h.b16 %v163
    %v253 = vunpack.c.l.b16 %v164
    %v254 = vunpack.c.h.b16 %v164
    %v255 = vunpack.c.l.b16 %v165
    %v256 = vunpack.c.h.b16 %v165
    %v257 = vunpack.c.l.b16 %v166
    %v258 = vunpack.c.h.b16 %v166
    %v259 = vunpack.c.l.b16 %v167
    %v260 = vunpack.c.h.b16 %v167
    %v261 = vunpack.c.l.b16 %v168
    %v262 = vunpack.c.h.b16 %v168
    %v263 = vunpack.c.l.b16 %v169
    %v264 = vunpack.c.h.b16 %v169
    %v265 = vunpack.c.l.b16 %v170
    %v266 = vunpack.c.h.b16 %v170
    %v267 = vunpack.c.l.b16 %v171
    %v268 = vunpack.c.h.b16 %v171
    %v269 = vunpack.c.l.b16 %v172
    %v270 = vunpack.c.h.b16 %v172
    %v271 = vunpack.c.l.b16 %v173
    %v272 = vunpack.c.h.b16 %v173
    %v273 = vunpack.c.l.b16 %v174
    %v274 = vunpack.c.h.b16 %v174
    %v275 = vunpack.c.l.b16 %v175
    %v276 = vunpack.c.h.b16 %v175
    %v277 = vunpack.c.l.b16 %v176
    %v278 = vunpack.c.h.b16 %v176
    %v279 = vpack.c.b16 %v217, %v215
    %v280 = vpack.c.b16 %v218, %v216
    %v281 = vpack.c.b16 %v221, %v219
    %v282 = vpack.c.b16 %v222, %v220
    %v283 = vpack.c.b16 %v225, %v223
    %v284 = vpack.c.b16 %v226, %v224
    %v285 = vpack.c.b16 %v229, %v227
    %v286 = vpack.c.b16 %v230, %v228
    %v287 = vpack.c.b16 %v233, %v231
    %v288 = vpack.c.b16 %v234, %v232
    %v289 = vpack.c.b16 %v237, %v235
    %v290 = vpack.c.b16 %v238, %v236
    %v291 = vpack.c.b16 %v241, %v239
    %v292 = vpack.c.b16 %v242, %v240
    %v293 = vpack.c.b16 %v245, %v243
    %v294 = vpack.c.b16 %v246, %v244
    %v295 = vpack.c.b16 %v249, %v247
    %v296 = vpack.c.b16 %v250, %v248
    %v297 = vpack.c.b16 %v253, %v251
    %v298 = vpack.c.b16 %v254, %v252
    %v299 = vpack.c.b16 %v257, %v255
    %v300 = vpack.c.b16 %v258, %v256
    %v301 = vpack.c.b16 %v261, %v259
    %v302 = vpack.c.b16 %v262, %v260
    %v303 = vpack.c.b16 %v265, %v263
    %v304 = vpack.c.b16 %v266, %v264
    %v305 = vpack.c.b16 %v269, %v267
    %v306 = vpack.c.b16 %v270, %v268
    %v307 = vpack.c.b16 %v273, %v271
    %v308 = vpack.c.b16 %v274, %v272
    %v309 = vpack.c.b16 %v277, %v275
    %v310 = vpack.c.b16 %v278, %v276
    %343 = vmatpush.bf16.msra.mxu0 %v293
    %344 = vmatpush.bf16.msra.mxu0 %v291
    %345 = vmatpush.bf16.msra.mxu0 %v289
    %346 = vmatpush.bf16.msra.mxu0 %v287
    %347 = vmatpush.bf16.msra.mxu0 %v285
    %348 = vmatpush.bf16.msra.mxu0 %v283
    %349 = vmatpush.bf16.msra.mxu0 %v281
    %350 = vmatpush.bf16.msra.mxu0 %v279
    %351 = vmatmul.bf16.gmra.mxu0 %v143
    %v352 = vpop.f32.mrf.mxu0
    %v353 = vadd.f32 %v179, %v352
    %v354 = vpop.f32.mrf.mxu0
    %v355 = vadd.f32 %v179, %v354
    %356 = vdwg.mxu0
    %357 = vmatpush.bf16.msra.mxu0 %v309
    %358 = vmatpush.bf16.msra.mxu0 %v307
    %359 = vmatpush.bf16.msra.mxu0 %v305
    %360 = vmatpush.bf16.msra.mxu0 %v303
    %361 = vmatpush.bf16.msra.mxu0 %v301
    %362 = vmatpush.bf16.msra.mxu0 %v299
    %363 = vmatpush.bf16.msra.mxu0 %v297
    %364 = vmatpush.bf16.msra.mxu0 %v295
    %365 = vmatmul.bf16.gmra.mxu0 %v144
    %v366 = vpop.f32.mrf.mxu0
    %v367 = vadd.f32 %v353, %v366
    %v368 = vpop.f32.mrf.mxu0
    %v369 = vadd.f32 %v355, %v368
    %370 = vdwg.mxu0
    %371 = vmatpush.bf16.msra.mxu0 %v294
    %372 = vmatpush.bf16.msra.mxu0 %v292
    %373 = vmatpush.bf16.msra.mxu0 %v290
    %374 = vmatpush.bf16.msra.mxu0 %v288
    %375 = vmatpush.bf16.msra.mxu0 %v286
    %376 = vmatpush.bf16.msra.mxu0 %v284
    %377 = vmatpush.bf16.msra.mxu0 %v282
    %378 = vmatpush.bf16.msra.mxu0 %v280
    %379 = vmatmul.bf16.gmra.mxu0 %v143
    %v380 = vpop.f32.mrf.mxu0
    %v381 = vadd.f32 %v180, %v380
    %v382 = vpop.f32.mrf.mxu0
    %v383 = vadd.f32 %v180, %v382
    %384 = vdwg.mxu0
    %385 = vmatpush.bf16.msra.mxu0 %v310
    %386 = vmatpush.bf16.msra.mxu0 %v308
    %387 = vmatpush.bf16.msra.mxu0 %v306
    %388 = vmatpush.bf16.msra.mxu0 %v304
    %389 = vmatpush.bf16.msra.mxu0 %v302
    %390 = vmatpush.bf16.msra.mxu0 %v300
    %391 = vmatpush.bf16.msra.mxu0 %v298
    %392 = vmatpush.bf16.msra.mxu0 %v296
    %393 = vmatmul.bf16.gmra.mxu0 %v144
    %v394 = vpop.f32.mrf.mxu0
    %v395 = vadd.f32 %v381, %v394
    %v396 = vpop.f32.mrf.mxu0
    %v397 = vadd.f32 %v383, %v396
    %398 = vdwg.mxu0
    %v399 = vmax.f32 %v367, 0.0
    %v400 = vmax.f32 %v395, 0.0
    %v401 = vmax.f32 %v369, 0.0
    %v402 = vmax.f32 %v397, 0.0
    %v403 = vpack.c.bf16 %v401, %v399
    %v404 = vpack.c.bf16 %v402, %v400
    %v405 = vld [vmem:[#allocation6] sm:$0xf]
    %v406 = vld [vmem:[#allocation6 + $0x4] sm:$0xf]
    %v407 = vld [vmem:[#allocation6 + $0x8] sm:$0xf]
    %v408 = vld [vmem:[#allocation6 + $0xc] sm:$0xf]
    %v409 = vld [vmem:[#allocation6 + $0x10] sm:$0xf]
    %v410 = vld [vmem:[#allocation6 + $0x14] sm:$0xf]
    %v411 = vld [vmem:[#allocation6 + $0x18] sm:$0xf]
    %v412 = vld [vmem:[#allocation6 + $0x1c] sm:$0xf]
    %v413 = vld [vmem:[#allocation6 + $0x20] sm:$0xf]
    %v414 = vld [vmem:[#allocation6 + $0x24] sm:$0xf]
    %v415 = vld [vmem:[#allocation6 + $0x28] sm:$0xf]
    %v416 = vld [vmem:[#allocation6 + $0x2c] sm:$0xf]
    %v417 = vld [vmem:[#allocation6 + $0x30] sm:$0xf]
    %v418 = vld [vmem:[#allocation6 + $0x34] sm:$0xf]
    %v419 = vld [vmem:[#allocation6 + $0x38] sm:$0xf]
    %v420 = vld [vmem:[#allocation6 + $0x3c] sm:$0xf]
    %v421 = vld [vmem:[#allocation6 + $0x40] sm:$0xf]
    %v422 = vld [vmem:[#allocation6 + $0x44] sm:$0xf]
    %v423 = vld [vmem:[#allocation6 + $0x48] sm:$0xf]
    %v424 = vld [vmem:[#allocation6 + $0x4c] sm:$0xf]
    %v425 = vld [vmem:[#allocation6 + $0x50] sm:$0xf]
    %v426 = vld [vmem:[#allocation6 + $0x54] sm:$0xf]
    %v427 = vld [vmem:[#allocation6 + $0x58] sm:$0xf]
    %v428 = vld [vmem:[#allocation6 + $0x5c] sm:$0xf]
    %v429 = vld [vmem:[#allocation6 + $0x60] sm:$0xf]
    %v430 = vld [vmem:[#allocation6 + $0x64] sm:$0xf]
    %v431 = vld [vmem:[#allocation6 + $0x68] sm:$0xf]
    %v432 = vld [vmem:[#allocation6 + $0x6c] sm:$0xf]
    %v433 = vld [vmem:[#allocation6 + $0x70] sm:$0xf]
    %v434 = vld [vmem:[#allocation6 + $0x74] sm:$0xf]
    %v435 = vld [vmem:[#allocation6 + $0x78] sm:$0xf]
    %v436 = vld [vmem:[#allocation6 + $0x7c] sm:$0xf]
    %v437 = vld [vmem:[%s6] sm:$0x1]
    %v439 = vperm.slane %v437, 0
    %v473 = vunpack.c.l.b16 %v405
    %v474 = vunpack.c.l.b16 %v406
    %v475 = vunpack.c.l.b16 %v407
    %v476 = vunpack.c.l.b16 %v408
    %v477 = vunpack.c.l.b16 %v409
    %v478 = vunpack.c.l.b16 %v410
    %v479 = vunpack.c.l.b16 %v411
    %v480 = vunpack.c.l.b16 %v412
    %v481 = vunpack.c.l.b16 %v413
    %v482 = vunpack.c.l.b16 %v414
    %v483 = vunpack.c.l.b16 %v415
    %v484 = vunpack.c.l.b16 %v416
    %v485 = vunpack.c.l.b16 %v417
    %v486 = vunpack.c.l.b16 %v418
    %v487 = vunpack.c.l.b16 %v419
    %v488 = vunpack.c.l.b16 %v420
    %v489 = vunpack.c.l.b16 %v421
    %v490 = vunpack.c.l.b16 %v422
    %v491 = vunpack.c.l.b16 %v423
    %v492 = vunpack.c.l.b16 %v424
    %v493 = vunpack.c.l.b16 %v425
    %v494 = vunpack.c.l.b16 %v426
    %v495 = vunpack.c.l.b16 %v427
    %v496 = vunpack.c.l.b16 %v428
    %v497 = vunpack.c.l.b16 %v429
    %v498 = vunpack.c.l.b16 %v430
    %v499 = vunpack.c.l.b16 %v431
    %v500 = vunpack.c.l.b16 %v432
    %v501 = vunpack.c.l.b16 %v433
    %v502 = vunpack.c.l.b16 %v434
    %v503 = vunpack.c.l.b16 %v435
    %v504 = vunpack.c.l.b16 %v436
    %v505 = vpack.c.b16 %v474, %v473
    %v506 = vpack.c.b16 %v476, %v475
    %v507 = vpack.c.b16 %v478, %v477
    %v508 = vpack.c.b16 %v480, %v479
    %v509 = vpack.c.b16 %v482, %v481
    %v510 = vpack.c.b16 %v484, %v483
    %v511 = vpack.c.b16 %v486, %v485
    %v512 = vpack.c.b16 %v488, %v487
    %v513 = vpack.c.b16 %v490, %v489
    %v514 = vpack.c.b16 %v492, %v491
    %v515 = vpack.c.b16 %v494, %v493
    %v516 = vpack.c.b16 %v496, %v495
    %v517 = vpack.c.b16 %v498, %v497
    %v518 = vpack.c.b16 %v500, %v499
    %v519 = vpack.c.b16 %v502, %v501
    %v520 = vpack.c.b16 %v504, %v503
    %537 = vmatpush.bf16.msra.mxu0 %v512
    %538 = vmatpush.bf16.msra.mxu0 %v511
    %539 = vmatpush.bf16.msra.mxu0 %v510
    %540 = vmatpush.bf16.msra.mxu0 %v509
    %541 = vmatpush.bf16.msra.mxu0 %v508
    %542 = vmatpush.bf16.msra.mxu0 %v507
    %543 = vmatpush.bf16.msra.mxu0 %v506
    %544 = vmatpush.bf16.msra.mxu0 %v505
    %545 = vmatmul.bf16.gmra.mxu0 %v403
    %v546 = vpop.f32.mrf.mxu0
    %v547 = vadd.f32 %v439, %v546
    %v548 = vpop.f32.mrf.mxu0
    %v549 = vadd.f32 %v439, %v548
    %550 = vdwg.mxu0
    %551 = vmatpush.bf16.msra.mxu0 %v520
    %552 = vmatpush.bf16.msra.mxu0 %v519
    %553 = vmatpush.bf16.msra.mxu0 %v518
    %554 = vmatpush.bf16.msra.mxu0 %v517
    %555 = vmatpush.bf16.msra.mxu0 %v516
    %556 = vmatpush.bf16.msra.mxu0 %v515
    %557 = vmatpush.bf16.msra.mxu0 %v514
    %558 = vmatpush.bf16.msra.mxu0 %v513
    %559 = vmatmul.bf16.gmra.mxu0 %v404
    %v560 = vpop.f32.mrf.mxu0
    %v561 = vadd.f32 %v547, %v560
    %v562 = vpop.f32.mrf.mxu0
    %v563 = vadd.f32 %v549, %v562
    %564 = vdwg.mxu0
    %v565 = vtanh.pop %v561
    %v566 = vtanh.pop %v563
    %v567 = vpack.c.bf16 %v565, %v565
    %v568 = vpack.c.bf16 %v566, %v566
    %569 = vst [vmem:[%s7] sm:$0xf] %v567
    %570 = vst [vmem:[%s7 + $0x4] sm:$0xf] %v568
    // Predicated region
    $region42: #{bc_forward.1} parent=1 // pred_check
      _
    $region43: #{bc_forward.1} parent=1 // pred_check_branch
      %572 = sbr.rel (0) target = $region45
    $region44: #{bc_forward.1} parent=1 // pred_region
      _
    $region45: #{bc_forward.1} parent=1 // pred_fallthru
      _
    // Predicated region
    $region46: #{bc_forward.1} parent=1 // pred_check
      _
    $region47: #{bc_forward.1} parent=1 // pred_check_branch
      %574 = sbr.rel (0) target = $region49
    $region48: #{bc_forward.1} parent=1 // pred_region
      _
    $region49: #{bc_forward.1} parent=1 // pred_fallthru
      _
    %575 = vsyncpa [#allocation3], 1
    %576 = vsyncpa [#allocation5], 1

</llo_original>
